<compile_context>
chip_gen: v7x
topology: tpu7x:2x2x1
jax: 0.10.0
libtpu: 0.0.40
codegen_flags: <defaults>
</compile_context>

<pallas_src>
import functools

import jax
import jax.numpy as jnp
from jax import lax
from jax.experimental import pallas as pl
from jax.experimental.pallas import tpu as pltpu


_VMEM_LIMIT = 32 * 1024 * 1024  # safe on v5e/v6e (128 MiB) and v7x (64 MiB physical)


def _pick_tile(n, preferred):
    """Largest tile <= preferred that divides n and satisfies the sublane (8) rule."""
    if n <= preferred:
        return n
    for t in range(preferred, 7, -1):
        if n % t == 0 and t % 8 == 0:
            return t
    return n  # no aligned divisor: use the whole axis as one tile


# ---------------------------------------------------------------------------
# Kernel 1: per-head QKV projection.  x (1, tn, C) @ W[which, h] (C, hd) -> q/k/v (1,1,tn,hd)
# ---------------------------------------------------------------------------
def _qkv_proj_kernel(x_ref, w_ref, q_ref, k_ref, v_ref):
    x = x_ref[0]                       # (tn, C), compute dtype
    # w_ref: (3, 1, C, hd); leading-dim indexing only (no lane slicing).
    q = jnp.dot(x, w_ref[0, 0], preferred_element_type=jnp.float32)
    k = jnp.dot(x, w_ref[1, 0], preferred_element_type=jnp.float32)
    v = jnp.dot(x, w_ref[2, 0], preferred_element_type=jnp.float32)
    q_ref[0, 0] = q.astype(q_ref.dtype)
    k_ref[0, 0] = k.astype(k_ref.dtype)
    v_ref[0, 0] = v.astype(v_ref.dtype)


# ---------------------------------------------------------------------------
# Kernel 2: flash attention with online softmax.  grid = (B, H, Nq, Nk), kv axis is reduction.
# ---------------------------------------------------------------------------
def _flash_attn_kernel(q_ref, k_ref, v_ref, o_ref, m_sc, l_sc, acc_sc):
    ki = pl.program_id(3)

    @pl.when(ki == 0)
    def _init():
        m_sc[...] = jnp.full(m_sc.shape, -jnp.inf, dtype=m_sc.dtype)
        l_sc[...] = jnp.zeros(l_sc.shape, dtype=l_sc.dtype)
        acc_sc[...] = jnp.zeros(acc_sc.shape, dtype=acc_sc.dtype)

    q = q_ref[0, 0]                    # (tq, hd)  (scale already folded into W_q)
    k = k_ref[0, 0]                    # (tk, hd)
    v = v_ref[0, 0]                    # (tk, hd)

    # scores (tq, tk): contract on the head dim; MXU in compute dtype, f32 accumulate.
    s = lax.dot_general(q, k, (((1,), (1,)), ((), ())),
                        preferred_element_type=jnp.float32)

    m_prev = m_sc[...]                                       # (tq, 1) f32
    m_new = jnp.maximum(m_prev, jnp.max(s, axis=-1, keepdims=True))
    alpha = jnp.exp(m_prev - m_new)                          # rescale of previous stats
    p = jnp.exp(s - m_new)                                   # (tq, tk) f32

    l_sc[...] = alpha * l_sc[...] + jnp.sum(p, axis=-1, keepdims=True)
    acc_sc[...] = alpha * acc_sc[...] + jnp.dot(
        p.astype(v.dtype), v, preferred_element_type=jnp.float32)
    m_sc[...] = m_new

    @pl.when(ki == pl.num_programs(3) - 1)
    def _finalize():
        # Exact reciprocal only on the once-per-tile normalize (off the hot kv loop);
        # keeps the f32 path within tight tolerances.  approx=True is fine in production.
        o_ref[0, 0] = (acc_sc[...] *
                       pl.reciprocal(l_sc[...], approx=False)).astype(o_ref.dtype)


# ---------------------------------------------------------------------------
# Kernel 3: output projection.  ctx (1, tn, C) @ W_proj (C, C) + b -> out (1, tn, C)
# ---------------------------------------------------------------------------
def _proj_kernel(x_ref, w_ref, b_ref, o_ref):
    y = jnp.dot(x_ref[0], w_ref[...], preferred_element_type=jnp.float32)
    o_ref[0] = (y + b_ref[...]).astype(o_ref.dtype)


# ---------------------------------------------------------------------------
# Wrapper
# ---------------------------------------------------------------------------
def attention_forward(x, w_qkv, w_proj, b_proj, *, num_heads,
                      compute_dtype=jnp.bfloat16,
                      q_block=128, kv_block=128, n_block=128):
    B, N, C = x.shape
    H = num_heads
    hd = C // H
    assert hd * H == C, "dim must be divisible by num_heads"
    out_dtype = x.dtype
    scale = float(hd) ** -0.5

    tq = _pick_tile(N, q_block)
    tk = _pick_tile(N, kv_block)
    tn = _pick_tile(N, n_block)

    # --- weight layout plumbing (one-time, wrapper side) ---
    # (C, 3C) -> (3, H, C, hd); fold the attention scale into W_q.
    w_heads = w_qkv.reshape(C, 3, H, hd).transpose(1, 2, 0, 3)
    scale_vec = jnp.asarray([scale, 1.0, 1.0], dtype=w_heads.dtype).reshape(3, 1, 1, 1)
    w_heads = (w_heads * scale_vec).astype(compute_dtype)

    x_c = x.astype(compute_dtype)
    w_proj_c = w_proj.astype(compute_dtype)
    b_proj_f32 = b_proj.astype(jnp.float32)

    # --- 1) QKV projection: grid (B, H, Nt), all parallel ---
    q, k, v = pl.pallas_call(
        _qkv_proj_kernel,
        out_shape=(jax.ShapeDtypeStruct((B, H, N, hd), compute_dtype),
                   jax.ShapeDtypeStruct((B, H, N, hd), compute_dtype),
                   jax.ShapeDtypeStruct((B, H, N, hd), compute_dtype)),
        grid_spec=pltpu.PrefetchScalarGridSpec(
            num_scalar_prefetch=0,
            grid=(B, H, N // tn),
            in_specs=[
                pl.BlockSpec((1, tn, C), lambda b, h, n: (b, n, 0)),
                # Constant block along the grid except h -> weights are not re-DMA'd across n.
                pl.BlockSpec((3, 1, C, hd), lambda b, h, n: (0, h, 0, 0)),
            ],
            out_specs=[
                pl.BlockSpec((1, 1, tn, hd), lambda b, h, n: (b, h, n, 0)),
                pl.BlockSpec((1, 1, tn, hd), lambda b, h, n: (b, h, n, 0)),
                pl.BlockSpec((1, 1, tn, hd), lambda b, h, n: (b, h, n, 0)),
            ]),
        compiler_params=pltpu.CompilerParams(
            dimension_semantics=("parallel", "parallel", "parallel"),
            vmem_limit_bytes=_VMEM_LIMIT),
    )(x_c, w_heads)

    # --- 2) Flash attention: grid (B, H, Nq, Nk); kv axis is the trailing reduction ---
    ctx = pl.pallas_call(
        _flash_attn_kernel,
        out_shape=jax.ShapeDtypeStruct((B, H, N, hd), compute_dtype),
        grid_spec=pltpu.PrefetchScalarGridSpec(
            num_scalar_prefetch=0,
            grid=(B, H, N // tq, N // tk),
            in_specs=[
                pl.BlockSpec((1, 1, tq, hd), lambda b, h, qi, ki: (b, h, qi, 0)),
                pl.BlockSpec((1, 1, tk, hd), lambda b, h, qi, ki: (b, h, ki, 0)),
                pl.BlockSpec((1, 1, tk, hd), lambda b, h, qi, ki: (b, h, ki, 0)),
            ],
            out_specs=pl.BlockSpec((1, 1, tq, hd), lambda b, h, qi, ki: (b, h, qi, 0)),
            scratch_shapes=[
                pltpu.VMEM((tq, 1), jnp.float32),    # running max m
                pltpu.VMEM((tq, 1), jnp.float32),    # running sum l
                pltpu.VMEM((tq, hd), jnp.float32),   # accumulator
            ]),
        compiler_params=pltpu.CompilerParams(
            dimension_semantics=("parallel", "parallel", "parallel", "arbitrary"),
            vmem_limit_bytes=_VMEM_LIMIT),
    )(q, k, v)

    # --- head merge (wrapper-side layout plumbing) then lane-dense output projection ---
    ctx2 = ctx.transpose(0, 2, 1, 3).reshape(B, N, C)

    out = pl.pallas_call(
        _proj_kernel,
        out_shape=jax.ShapeDtypeStruct((B, N, C), out_dtype),
        grid_spec=pltpu.PrefetchScalarGridSpec(
            num_scalar_prefetch=0,
            grid=(B, N // tn),
            in_specs=[
                pl.BlockSpec((1, tn, C), lambda b, n: (b, n, 0)),
                pl.BlockSpec((C, C), lambda b, n: (0, 0)),      # constant index -> loaded once
                pl.BlockSpec((1, C), lambda b, n: (0, 0)),
            ],
            out_specs=pl.BlockSpec((1, tn, C), lambda b, n: (b, n, 0)),
        ),
        compiler_params=pltpu.CompilerParams(
            dimension_semantics=("parallel", "parallel"),
            vmem_limit_bytes=_VMEM_LIMIT),
    )(ctx2, w_proj_c, b_proj_f32)

    return out


def attention_reference(x, w_qkv, w_proj, b_proj, *, num_heads):
    """Pure-JAX reference mirroring the PyTorch forward (f32)."""
    B, N, C = x.shape
    hd = C // num_heads
    scale = float(hd) ** -0.5
    qkv = jnp.einsum('bnc,cd->bnd', x, w_qkv)                    # (B, N, 3C)
    qkv = qkv.reshape(B, N, 3, num_heads, hd).transpose(2, 0, 3, 1, 4)
    q, k, v = qkv[0], qkv[1], qkv[2]                             # (B, H, N, hd)
    attn = jnp.einsum('bhnd,bhmd->bhnm', q, k) * scale
    attn = jax.nn.softmax(attn, axis=-1)
    ctx = jnp.einsum('bhnm,bhmd->bhnd', attn, v)                 # (B, H, N, hd)
    ctx = ctx.transpose(0, 2, 1, 3).reshape(B, N, C)
    return jnp.einsum('bnc,cd->bnd', ctx, w_proj) + b_proj[0]


if __name__ == "__main__":
    B, N, C = 2, 8, 32
    num_heads = 8

    key = jax.random.PRNGKey(0)
    kx, kqkv, kproj, kb = jax.random.split(key, 4)

    x = jax.random.normal(kx, (B, N, C), dtype=jnp.float32)
    # Deterministic synthetic parameters (nn.Linear(dim, 3*dim, bias=False) / nn.Linear(dim, dim))
    w_qkv = jax.random.normal(kqkv, (C, 3 * C), dtype=jnp.float32) * (1.0 / C ** 0.5)
    w_proj = jax.random.normal(kproj, (C, C), dtype=jnp.float32) * (1.0 / C ** 0.5)
    b_proj = jax.random.normal(kb, (1, C), dtype=jnp.float32) * 0.01

    ref = attention_reference(x, w_qkv, w_proj, b_proj, num_heads=num_heads)

    # Strict correctness check on the f32 compute path.
    out_f32 = attention_forward(x, w_qkv, w_proj, b_proj, num_heads=num_heads,
                                compute_dtype=jnp.float32)
    out_f32 = jax.block_until_ready(out_f32)
    assert out_f32.shape == (B, N, C)
    assert jnp.allclose(out_f32, ref, atol=1e-4, rtol=1e-4), "f32 mismatch vs reference"

    # Production path: bf16 MXU inputs, f32 softmax/accumulation (looser tolerance).
    out_bf16 = attention_forward(x, w_qkv, w_proj, b_proj, num_heads=num_heads,
                                 compute_dtype=jnp.bfloat16)
    out_bf16 = jax.block_until_ready(out_bf16)
    assert out_bf16.shape == (B, N, C)
    assert bool(jnp.all(jnp.isfinite(out_bf16)))
    assert jnp.allclose(out_bf16, ref, atol=1e-1, rtol=1e-1), "bf16 mismatch vs reference"

    print("KERNEL_OK")
</pallas_src>

<mosaic_0001>
module attributes {stable_mosaic.version = 11 : i64} {
  func.func @_qkv_proj_kernel(%arg0: i32, %arg1: i32, %arg2: i32, %arg3: memref<1x8x32xf32, #tpu.memory_space<vmem>>, %arg4: memref<3x1x32x4xf32, #tpu.memory_space<vmem>>, %arg5: memref<1x1x8x4xf32, #tpu.memory_space<vmem>>, %arg6: memref<1x1x8x4xf32, #tpu.memory_space<vmem>>, %arg7: memref<1x1x8x4xf32, #tpu.memory_space<vmem>>) attributes {dimension_semantics = [#tpu.dimension_semantics<parallel>, #tpu.dimension_semantics<parallel>, #tpu.dimension_semantics<parallel>], iteration_bounds = array<i64: 2, 8, 1>, scalar_prefetch = 0 : i64, scratch_operands = 0 : i64, tpu.core_type = #tpu.core_type<tc>, window_params = [{transform_indices = @transform_0, window_bounds = array<i64: 1, 8, 32>}, {transform_indices = @transform_1, window_bounds = array<i64: 3, 1, 32, 4>}, {transform_indices = @transform_2, window_bounds = array<i64: 1, 1, 8, 4>}, {transform_indices = @transform_3, window_bounds = array<i64: 1, 1, 8, 4>}, {transform_indices = @transform_4, window_bounds = array<i64: 1, 1, 8, 4>}]} {
    %c0 = arith.constant 0 : index
    %c0_0 = arith.constant 0 : index
    %c0_1 = arith.constant 0 : index
    %0 = vector.load %arg3[%c0, %c0_0, %c0_1] : memref<1x8x32xf32, #tpu.memory_space<vmem>>, vector<1x8x32xf32>
    %1 = vector.shape_cast %0 : vector<1x8x32xf32> to vector<8x32xf32>
    %c0_2 = arith.constant 0 : index
    %c0_3 = arith.constant 0 : index
    %c0_4 = arith.constant 0 : index
    %c0_5 = arith.constant 0 : index
    %2 = vector.load %arg4[%c0_2, %c0_3, %c0_4, %c0_5] : memref<3x1x32x4xf32, #tpu.memory_space<vmem>>, vector<1x1x32x4xf32>
    %3 = vector.shape_cast %2 : vector<1x1x32x4xf32> to vector<32x4xf32>
    %cst = arith.constant dense<0.000000e+00> : vector<8x4xf32>
    %4 = tpu.matmul %1, %3, %cst {dimension_numbers = #tpu.dot_dimension_numbers<[1], [0], [0], [1], [0, 0, 1, 1], [], []>} : vector<8x32xf32>, vector<32x4xf32>, vector<8x4xf32> -> vector<8x4xf32>
    %c1 = arith.constant 1 : index
    %c0_6 = arith.constant 0 : index
    %c0_7 = arith.constant 0 : index
    %c0_8 = arith.constant 0 : index
    %5 = vector.load %arg4[%c1, %c0_6, %c0_7, %c0_8] : memref<3x1x32x4xf32, #tpu.memory_space<vmem>>, vector<1x1x32x4xf32>
    %6 = vector.shape_cast %5 : vector<1x1x32x4xf32> to vector<32x4xf32>
    %cst_9 = arith.constant dense<0.000000e+00> : vector<8x4xf32>
    %7 = tpu.matmul %1, %6, %cst_9 {dimension_numbers = #tpu.dot_dimension_numbers<[1], [0], [0], [1], [0, 0, 1, 1], [], []>} : vector<8x32xf32>, vector<32x4xf32>, vector<8x4xf32> -> vector<8x4xf32>
    %c2 = arith.constant 2 : index
    %c0_10 = arith.constant 0 : index
    %c0_11 = arith.constant 0 : index
    %c0_12 = arith.constant 0 : index
    %8 = vector.load %arg4[%c2, %c0_10, %c0_11, %c0_12] : memref<3x1x32x4xf32, #tpu.memory_space<vmem>>, vector<1x1x32x4xf32>
    %9 = vector.shape_cast %8 : vector<1x1x32x4xf32> to vector<32x4xf32>
    %cst_13 = arith.constant dense<0.000000e+00> : vector<8x4xf32>
    %10 = tpu.matmul %1, %9, %cst_13 {dimension_numbers = #tpu.dot_dimension_numbers<[1], [0], [0], [1], [0, 0, 1, 1], [], []>} : vector<8x32xf32>, vector<32x4xf32>, vector<8x4xf32> -> vector<8x4xf32>
    %c0_14 = arith.constant 0 : index
    %c0_15 = arith.constant 0 : index
    %c0_16 = arith.constant 0 : index
    %c0_17 = arith.constant 0 : index
    %11 = vector.load %arg5[%c0_14, %c0_15, %c0_16, %c0_17] : memref<1x1x8x4xf32, #tpu.memory_space<vmem>>, vector<1x1x8x4xf32>
    %12 = vector.shape_cast %11 : vector<1x1x8x4xf32> to vector<8x4xf32>
    %13 = vector.shape_cast %4 : vector<8x4xf32> to vector<1x1x8x4xf32>
    tpu.vector_store %arg5[%c0_14, %c0_15, %c0_16, %c0_17], %13 {strides = array<i32>} : memref<1x1x8x4xf32, #tpu.memory_space<vmem>>, vector<1x1x8x4xf32>,
    %c0_18 = arith.constant 0 : index
    %c0_19 = arith.constant 0 : index
    %c0_20 = arith.constant 0 : index
    %c0_21 = arith.constant 0 : index
    %14 = vector.load %arg6[%c0_18, %c0_19, %c0_20, %c0_21] : memref<1x1x8x4xf32, #tpu.memory_space<vmem>>, vector<1x1x8x4xf32>
    %15 = vector.shape_cast %14 : vector<1x1x8x4xf32> to vector<8x4xf32>
    %16 = vector.shape_cast %7 : vector<8x4xf32> to vector<1x1x8x4xf32>
    tpu.vector_store %arg6[%c0_18, %c0_19, %c0_20, %c0_21], %16 {strides = array<i32>} : memref<1x1x8x4xf32, #tpu.memory_space<vmem>>, vector<1x1x8x4xf32>,
    %c0_22 = arith.constant 0 : index
    %c0_23 = arith.constant 0 : index
    %c0_24 = arith.constant 0 : index
    %c0_25 = arith.constant 0 : index
    %17 = vector.load %arg7[%c0_22, %c0_23, %c0_24, %c0_25] : memref<1x1x8x4xf32, #tpu.memory_space<vmem>>, vector<1x1x8x4xf32>
    %18 = vector.shape_cast %17 : vector<1x1x8x4xf32> to vector<8x4xf32>
    %19 = vector.shape_cast %10 : vector<8x4xf32> to vector<1x1x8x4xf32>
    tpu.vector_store %arg7[%c0_22, %c0_23, %c0_24, %c0_25], %19 {strides = array<i32>} : memref<1x1x8x4xf32, #tpu.memory_space<vmem>>, vector<1x1x8x4xf32>,
    return
  }
  func.func @transform_0(%arg0: i32, %arg1: i32, %arg2: i32) -> (i32, i32, i32) {
    %c0_i32 = arith.constant 0 : i32
    %c0_i32_0 = arith.constant 0 : i32
    return %arg0, %arg2, %c0_i32 : i32, i32, i32
  }
  func.func @transform_1(%arg0: i32, %arg1: i32, %arg2: i32) -> (i32, i32, i32, i32) {
    %c0_i32 = arith.constant 0 : i32
    %c0_i32_0 = arith.constant 0 : i32
    %c0_i32_1 = arith.constant 0 : i32
    %c0_i32_2 = arith.constant 0 : i32
    return %c0_i32, %arg1, %c0_i32_0, %c0_i32_1 : i32, i32, i32, i32
  }
  func.func @transform_2(%arg0: i32, %arg1: i32, %arg2: i32) -> (i32, i32, i32, i32) {
    %c0_i32 = arith.constant 0 : i32
    %c0_i32_0 = arith.constant 0 : i32
    return %arg0, %arg1, %arg2, %c0_i32 : i32, i32, i32, i32
  }
  func.func @transform_3(%arg0: i32, %arg1: i32, %arg2: i32) -> (i32, i32, i32, i32) {
    %c0_i32 = arith.constant 0 : i32
    %c0_i32_0 = arith.constant 0 : i32
    return %arg0, %arg1, %arg2, %c0_i32 : i32, i32, i32, i32
  }
  func.func @transform_4(%arg0: i32, %arg1: i32, %arg2: i32) -> (i32, i32, i32, i32) {
    %c0_i32 = arith.constant 0 : i32
    %c0_i32_0 = arith.constant 0 : i32
    return %arg0, %arg1, %arg2, %c0_i32 : i32, i32, i32, i32
  }
}

</mosaic_0001>

<llo_original>
// kernel: tpu_custom_call.1
$region0: #{tpu_custom_call.1}
  #allocation0 [shape = 'u32[]', space=smem, size = 0x4, offset = 0x4, fixed_abs, tag = 'smem constant byte address 0x4 - core index']
  #allocation1 [shape = 'u32[144,128]{1,0:T(1,128)}', space=vmem, size = 0x12000, scoped, tag = 'internal scratch']
  %s0 = inlined_call_operand.vmem [shape: f32[2,8,32], index: 0, kind: input, shape index: {}]
  %s1 = inlined_call_operand.vmem [shape: f32[3,8,32,4], index: 1, kind: input, shape index: {}]
  %s2 = inlined_call_operand.vmem [shape: f32[2,8,8,4], index: 2, kind: output, shape index: {0}]
  %s3 = inlined_call_operand.vmem [shape: f32[2,8,8,4], index: 3, kind: output, shape index: {1}]
  %s4 = inlined_call_operand.vmem [shape: f32[2,8,8,4], index: 4, kind: output, shape index: {2}]
  %5 = xla_tuple %s2, %s3, %s4
  %s6 = sld [smem:[#allocation0]]
  $region95: #{tpu_custom_call.1} parent=0
    _
  %s8 = ssub.s32 1, %s6
  %s9 = scalar_select 0, %s8, %s6
  $region1: #{tpu_custom_call.1} parent=0
    #allocation2 [shape = 'u8[98304]{0}', space=vmem, size = 0x18000, scoped, tag = 'input window, operand 1']
    loop: start=0, step=1, limit=18
    $region2: #{tpu_custom_call.1} parent=1 // loop_pre_header
      _
    $region3: #{tpu_custom_call.1} parent=1 // loop_header
      %s11 = sphi 0, %s15
      %p12 = scmp.ge.s32.totalorder %s11, 18
      %s18 = sphi 0, %s37
      %s19 = sphi 0, %s33
      %s20 = sphi 0, %s29
      %s21 = sphi 0, %s18
      %s22 = sphi 0, %s19
      %s23 = sphi 0, %s20
      %s24 = sphi 0, %s21
      %s25 = sphi 0, %s22
      %s26 = sphi 0, %s23
      %s42 = sphi 0, %s44
      %s45 = sphi 0, %s42
      %s46 = sphi 0, %s45
      %s62 = sphi 0, %s46
      %s68 = sphi 0, %s70
      %s71 = sphi 0, %s68
      %s72 = sphi 0, %s71
      %s88 = sphi 0, %s72
      %s98 = sphi 0, %s100
      %s101 = sphi 0, %s98
      %s102 = sphi 0, %s101
      %s118 = sphi 0, %s102
      %s128 = sphi 0, %s130
      %s131 = sphi 0, %s128
      %s132 = sphi 0, %s131
      %s148 = sphi 0, %s132
      %s158 = sphi 0, %s160
      %s161 = sphi 0, %s158
      %s162 = sphi 0, %s161
      %s178 = sphi 0, %s162
    $region4: #{tpu_custom_call.1} parent=1 // loop_header_branch
      %14 = sbr.rel (%p12) target = $region8
    $region5: #{tpu_custom_call.1} parent=1 // loop_body
      %s16 = ssub.s32 %s11, 1
      %s17 = ssub.s32 %s11, 2
      %s27 = sadd.s32 1, %s20
      %p28 = scmp.ge.s32.totalorder %s27, 1
      %s29 = scalar_select %p28, 0, %s27
      %s30 = sadd.s32 1, %s19
      %s31 = scalar_select %p28, %s30, %s19
      %p32 = scmp.ge.s32.totalorder %s31, 8
      %s33 = scalar_select %p32, 0, %s31
      %s34 = sadd.s32 1, %s18
      %s35 = scalar_select %p32, %s34, %s18
      %p36 = scmp.ge.s32.totalorder %s35, 2
      %s37 = scalar_select %p36, 0, %s35
      %s38 = ssub.s32 %s18, %s37
      %s39 = ssub.s32 %s20, %s29
      %s40 = sor.u32 %s38, %s39
      %p41 = scmp.eq.s32.totalorder %s40, 0
      %s43 = sadd.s32 %s42, 1
      %s44 = scalar_select %p41, %s42, %s43
      %p47 = pneg %p41
      %p48 = scmp.eq.s32.totalorder %s11, 15
      %p49 = por %p47, %p48
      %p50 = scmp.ne.s32.totalorder %s42, %s45
      %p51 = scmp.eq.s32.totalorder %s11, 0
      %p52 = por %p50, %p51
      %p53 = scmp.ne.s32.totalorder %s42, %s45
      %p54 = scmp.eq.s32.totalorder %s16, 15
      %p55 = por %p53, %p54
      %p56 = scmp.ne.s32.totalorder %s45, %s46
      %p57 = scmp.eq.s32.totalorder %s16, 0
      %p58 = por %p56, %p57
      %p59 = scmp.ne.s32.totalorder %s45, %s46
      %p60 = scmp.eq.s32.totalorder %s17, 15
      %p61 = por %p59, %p60
      %p63 = scmp.ne.s32.totalorder %s46, %s62
      %p64 = scmp.eq.s32.totalorder %s17, 0
      %p65 = por %p63, %p64
      %s66 = ssub.s32 %s19, %s33
      %p67 = scmp.eq.s32.totalorder %s66, 0
      %s69 = sadd.s32 %s68, 1
      %s70 = scalar_select %p67, %s68, %s69
      %p73 = pneg %p67
      %p74 = scmp.eq.s32.totalorder %s11, 15
      %p75 = por %p73, %p74
      %p76 = scmp.ne.s32.totalorder %s68, %s71
      %p77 = scmp.eq.s32.totalorder %s11, 0
      %p78 = por %p76, %p77
      %p79 = scmp.ne.s32.totalorder %s68, %s71
      %p80 = scmp.eq.s32.totalorder %s16, 15
      %p81 = por %p79, %p80
      %p82 = scmp.ne.s32.totalorder %s71, %s72
      %p83 = scmp.eq.s32.totalorder %s16, 0
      %p84 = por %p82, %p83
      %p85 = scmp.ne.s32.totalorder %s71, %s72
      %p86 = scmp.eq.s32.totalorder %s17, 15
      %p87 = por %p85, %p86
      %p89 = scmp.ne.s32.totalorder %s72, %s88
      %p90 = scmp.eq.s32.totalorder %s17, 0
      %p91 = por %p89, %p90
      %s92 = ssub.s32 %s18, %s37
      %s93 = ssub.s32 %s19, %s33
      %s94 = sor.u32 %s92, %s93
      %s95 = ssub.s32 %s20, %s29
      %s96 = sor.u32 %s94, %s95
      %p97 = scmp.eq.s32.totalorder %s96, 0
      %s99 = sadd.s32 %s98, 1
      %s100 = scalar_select %p97, %s98, %s99
      %p103 = pneg %p97
      %p104 = scmp.eq.s32.totalorder %s11, 15
      %p105 = por %p103, %p104
      %p106 = scmp.ne.s32.totalorder %s98, %s101
      %p107 = scmp.eq.s32.totalorder %s11, 0
      %p108 = por %p106, %p107
      %p109 = scmp.ne.s32.totalorder %s98, %s101
      %p110 = scmp.eq.s32.totalorder %s16, 15
      %p111 = por %p109, %p110
      %p112 = scmp.ne.s32.totalorder %s101, %s102
      %p113 = scmp.eq.s32.totalorder %s16, 0
      %p114 = por %p112, %p113
      %p115 = scmp.ne.s32.totalorder %s101, %s102
      %p116 = scmp.eq.s32.totalorder %s17, 15
      %p117 = por %p115, %p116
      %p119 = scmp.ne.s32.totalorder %s102, %s118
      %p120 = scmp.eq.s32.totalorder %s17, 0
      %p121 = por %p119, %p120
      %s122 = ssub.s32 %s18, %s37
      %s123 = ssub.s32 %s19, %s33
      %s124 = sor.u32 %s122, %s123
      %s125 = ssub.s32 %s20, %s29
      %s126 = sor.u32 %s124, %s125
      %p127 = scmp.eq.s32.totalorder %s126, 0
      %s129 = sadd.s32 %s128, 1
      %s130 = scalar_select %p127, %s128, %s129
      %p133 = pneg %p127
      %p134 = scmp.eq.s32.totalorder %s11, 15
      %p135 = por %p133, %p134
      %p136 = scmp.ne.s32.totalorder %s128, %s131
      %p137 = scmp.eq.s32.totalorder %s11, 0
      %p138 = por %p136, %p137
      %p139 = scmp.ne.s32.totalorder %s128, %s131
      %p140 = scmp.eq.s32.totalorder %s16, 15
      %p141 = por %p139, %p140
      %p142 = scmp.ne.s32.totalorder %s131, %s132
      %p143 = scmp.eq.s32.totalorder %s16, 0
      %p144 = por %p142, %p143
      %p145 = scmp.ne.s32.totalorder %s131, %s132
      %p146 = scmp.eq.s32.totalorder %s17, 15
      %p147 = por %p145, %p146
      %p149 = scmp.ne.s32.totalorder %s132, %s148
      %p150 = scmp.eq.s32.totalorder %s17, 0
      %p151 = por %p149, %p150
      %s152 = ssub.s32 %s18, %s37
      %s153 = ssub.s32 %s19, %s33
      %s154 = sor.u32 %s152, %s153
      %s155 = ssub.s32 %s20, %s29
      %s156 = sor.u32 %s154, %s155
      %p157 = scmp.eq.s32.totalorder %s156, 0
      %s159 = sadd.s32 %s158, 1
      %s160 = scalar_select %p157, %s158, %s159
      %p163 = pneg %p157
      %p164 = scmp.eq.s32.totalorder %s11, 15
      %p165 = por %p163, %p164
      %p166 = scmp.ne.s32.totalorder %s158, %s161
      %p167 = scmp.eq.s32.totalorder %s11, 0
      %p168 = por %p166, %p167
      %p169 = scmp.ne.s32.totalorder %s158, %s161
      %p170 = scmp.eq.s32.totalorder %s16, 15
      %p171 = por %p169, %p170
      %p172 = scmp.ne.s32.totalorder %s161, %s162
      %p173 = scmp.eq.s32.totalorder %s16, 0
      %p174 = por %p172, %p173
      %p175 = scmp.ne.s32.totalorder %s161, %s162
      %p176 = scmp.eq.s32.totalorder %s17, 15
      %p177 = por %p175, %p176
      %p179 = scmp.ne.s32.totalorder %s162, %s178
      %p180 = scmp.eq.s32.totalorder %s17, 0
      %p181 = por %p179, %p180
      %p182 = scmp.le.s32.totalorder 1, %s11
      %p183 = scmp.lt.s32.totalorder %s11, 17
      %p184 = pnand %p182, %p183
      %p185 = pneg %p184
      // Predicated region
      $region9: #{tpu_custom_call.1} parent=5 // pred_check
        _
      $region10: #{tpu_custom_call.1} parent=5 // pred_check_branch
        %187 = sbr.rel (%p184) target = $region12
      $region11: #{tpu_custom_call.1} parent=5 // pred_region
        %s188 = ssub.s32 %s11, 1
      $region12: #{tpu_custom_call.1} parent=5 // pred_fallthru
        _
      %p189 = scmp.lt.s32.totalorder %s11, 16
      // Predicated region
      $region13: #{tpu_custom_call.1} parent=5 // pred_check
        %p190 = pneg %p189
      $region14: #{tpu_custom_call.1} parent=5 // pred_check_branch
        %192 = sbr.rel (%p190) target = $region16
      $region15: #{tpu_custom_call.1} parent=5 // pred_region
        // Predicated region
        $region17: #{tpu_custom_call.1} parent=15 // pred_check
          %p193 = pneg %p52
        $region18: #{tpu_custom_call.1} parent=15 // pred_check_branch
          %195 = sbr.rel (%p193) target = $region20
        $region19: #{tpu_custom_call.1} parent=15 // pred_region
          %p196 = scmp.lt.s32.totalorder %s18, 1
          %s197 = scalar_select %p196, %s18, 1
          %p198 = scmp.lt.s32.totalorder %s20, 0
          %s199 = scalar_select %p198, %s20, 0
          %s200 = sadd.s32 %s199, %s197
          %s201 = smul.addr %s200, 8
          %s202 = scalar_lea.vmem %s0, %s201
        $region20: #{tpu_custom_call.1} parent=15 // pred_fallthru
          _
        // Predicated region
        $region21: #{tpu_custom_call.1} parent=15 // pred_check
          %p203 = pneg %p78
        $region22: #{tpu_custom_call.1} parent=15 // pred_check_branch
          %205 = sbr.rel (%p203) target = $region24
        $region23: #{tpu_custom_call.1} parent=15 // pred_region
          %s206 = sand.u32 %s68, 1
          %s207 = sand.u32 %s68, 1
          %s208 = smul.addr %s207, 96
          %s209 = scalar_lea.vmem [#allocation2], %s208
          %s210 = smul.addr %s19, 4
          %s211 = smul.addr %s210, 8
          %s212 = scalar_lea.vmem %s1, %s211
          // Predicated region
          $region25: #{tpu_custom_call.1} parent=23 // pred_check
            _
          $region26: #{tpu_custom_call.1} parent=23 // pred_check_branch
            %214 = sbr.rel (0) target = $region28
          $region27: #{tpu_custom_call.1} parent=23 // pred_region
            // Predicated region
            $region29: #{tpu_custom_call.1} parent=27 // pred_check
              _
            $region30: #{tpu_custom_call.1} parent=27 // pred_check_branch
              %216 = sbr.rel (0) target = $region32
            $region31: #{tpu_custom_call.1} parent=27 // pred_region
              // Predicated region
              $region44: #{tpu_custom_call.1} parent=31 // pred_check
                _
              $region45: #{tpu_custom_call.1} parent=31 // pred_check_branch
                %253 = sbr.rel (0) target = $region47
              $region46: #{tpu_custom_call.1} parent=31 // pred_region
                loop: start=0, step=1, limit=1
                $region48: #{tpu_custom_call.1} parent=46 // loop_pre_header
                  _
                $region49: #{tpu_custom_call.1} parent=46 // loop_header
                  %s255 = sphi 0, %s259
                  %p256 = scmp.ge.s32.totalorder %s255, 1
                  %s260 = sphi %s212, %s212
                  %s261 = sphi %s209, %s209
                $region50: #{tpu_custom_call.1} parent=46 // loop_header_branch
                  %258 = sbr.rel (%p256) target = $region54
                $region51: #{tpu_custom_call.1} parent=46 // loop_body
                  %v262 = vld [vmem:[%s260] sm:$0xff]
                  %263 = vst [vmem:[%s261] sm:$0xff] %v262
                  %v264 = vld [vmem:[%s260 + $0x8] sm:$0xff]
                  %265 = vst [vmem:[%s261 + $0x8] sm:$0xff] %v264
                  %v266 = vld [vmem:[%s260 + $0x10] sm:$0xff]
                  %267 = vst [vmem:[%s261 + $0x10] sm:$0xff] %v266
                  %v268 = vld [vmem:[%s260 + $0x18] sm:$0xff]
                  %269 = vst [vmem:[%s261 + $0x18] sm:$0xff] %v268
                  %v270 = vld [vmem:[%s260 + $0x100] sm:$0xff]
                  %271 = vst [vmem:[%s261 + $0x20] sm:$0xff] %v270
                  %v272 = vld [vmem:[%s260 + $0x108] sm:$0xff]
                  %273 = vst [vmem:[%s261 + $0x28] sm:$0xff] %v272
                  %v274 = vld [vmem:[%s260 + $0x110] sm:$0xff]
                  %275 = vst [vmem:[%s261 + $0x30] sm:$0xff] %v274
                  %v276 = vld [vmem:[%s260 + $0x118] sm:$0xff]
                  %277 = vst [vmem:[%s261 + $0x38] sm:$0xff] %v276
                  %v278 = vld [vmem:[%s260 + $0x200] sm:$0xff]
                  %279 = vst [vmem:[%s261 + $0x40] sm:$0xff] %v278
                  %v280 = vld [vmem:[%s260 + $0x208] sm:$0xff]
                  %281 = vst [vmem:[%s261 + $0x48] sm:$0xff] %v280
                  %v282 = vld [vmem:[%s260 + $0x210] sm:$0xff]
                  %283 = vst [vmem:[%s261 + $0x50] sm:$0xff] %v282
                  %v284 = vld [vmem:[%s260 + $0x218] sm:$0xff]
                  %285 = vst [vmem:[%s261 + $0x58] sm:$0xff] %v284
                $region52: #{tpu_custom_call.1} parent=46 // loop_footer
                  %s259 = sadd.s32 1, %s255
                $region53: #{tpu_custom_call.1} parent=46 // loop_footer_branch
                  %254 = sbr.rel target = $region49
                $region54: #{tpu_custom_call.1} parent=46 // loop_exit
                  _
              $region47: #{tpu_custom_call.1} parent=31 // pred_fallthru
                _
              // Predicated region
              $region55: #{tpu_custom_call.1} parent=31 // pred_check
                _
              $region56: #{tpu_custom_call.1} parent=31 // pred_check_branch
                %287 = sbr.rel target = $region58
              $region57: #{tpu_custom_call.1} parent=31 // pred_region
                _
              $region58: #{tpu_custom_call.1} parent=31 // pred_fallthru
                _
            $region32: #{tpu_custom_call.1} parent=27 // pred_fallthru
              _
            // Predicated region
            $region33: #{tpu_custom_call.1} parent=27 // pred_check
              _
            $region34: #{tpu_custom_call.1} parent=27 // pred_check_branch
              %218 = sbr.rel target = $region36
            $region35: #{tpu_custom_call.1} parent=27 // pred_region
              loop: start=0, step=1, limit=1
              $region37: #{tpu_custom_call.1} parent=35 // loop_pre_header
                _
              $region38: #{tpu_custom_call.1} parent=35 // loop_header
                %s221 = sphi 0, %s225
                %p222 = scmp.ge.s32.totalorder %s221, 1
                %s226 = sphi %s212, %s212
                %s227 = sphi %s209, %s209
              $region39: #{tpu_custom_call.1} parent=35 // loop_header_branch
                %224 = sbr.rel (%p222) target = $region43
              $region40: #{tpu_custom_call.1} parent=35 // loop_body
                %v228 = vld [vmem:[%s226] sm:$0xff]
                %229 = vst [vmem:[%s227] sm:$0xff] %v228
                %v230 = vld [vmem:[%s226 + $0x8] sm:$0xff]
                %231 = vst [vmem:[%s227 + $0x8] sm:$0xff] %v230
                %v232 = vld [vmem:[%s226 + $0x10] sm:$0xff]
                %233 = vst [vmem:[%s227 + $0x10] sm:$0xff] %v232
                %v234 = vld [vmem:[%s226 + $0x18] sm:$0xff]
                %235 = vst [vmem:[%s227 + $0x18] sm:$0xff] %v234
                %v236 = vld [vmem:[%s226 + $0x100] sm:$0xff]
                %237 = vst [vmem:[%s227 + $0x20] sm:$0xff] %v236
                %v238 = vld [vmem:[%s226 + $0x108] sm:$0xff]
                %239 = vst [vmem:[%s227 + $0x28] sm:$0xff] %v238
                %v240 = vld [vmem:[%s226 + $0x110] sm:$0xff]
                %241 = vst [vmem:[%s227 + $0x30] sm:$0xff] %v240
                %v242 = vld [vmem:[%s226 + $0x118] sm:$0xff]
                %243 = vst [vmem:[%s227 + $0x38] sm:$0xff] %v242
                %v244 = vld [vmem:[%s226 + $0x200] sm:$0xff]
                %245 = vst [vmem:[%s227 + $0x40] sm:$0xff] %v244
                %v246 = vld [vmem:[%s226 + $0x208] sm:$0xff]
                %247 = vst [vmem:[%s227 + $0x48] sm:$0xff] %v246
                %v248 = vld [vmem:[%s226 + $0x210] sm:$0xff]
                %249 = vst [vmem:[%s227 + $0x50] sm:$0xff] %v248
                %v250 = vld [vmem:[%s226 + $0x218] sm:$0xff]
                %251 = vst [vmem:[%s227 + $0x58] sm:$0xff] %v250
              $region41: #{tpu_custom_call.1} parent=35 // loop_footer
                %s225 = sadd.s32 1, %s221
              $region42: #{tpu_custom_call.1} parent=35 // loop_footer_branch
                %220 = sbr.rel target = $region38
              $region43: #{tpu_custom_call.1} parent=35 // loop_exit
                _
            $region36: #{tpu_custom_call.1} parent=27 // pred_fallthru
              _
          $region28: #{tpu_custom_call.1} parent=23 // pred_fallthru
            _
          %288 = vnop
        $region24: #{tpu_custom_call.1} parent=15 // pred_fallthru
          _
      $region16: #{tpu_custom_call.1} parent=5 // pred_fallthru
        _
      %p289 = scmp.le.s32.totalorder 1, %s11
      %p290 = scmp.lt.s32.totalorder %s11, 17
      %p291 = pnand %p289, %p290
      %p292 = pneg %p291
      // Predicated region
      $region59: #{tpu_custom_call.1} parent=5 // pred_check
        _
      $region60: #{tpu_custom_call.1} parent=5 // pred_check_branch
        %294 = sbr.rel (%p291) target = $region62
      $region61: #{tpu_custom_call.1} parent=5 // pred_region
        %s295 = ssub.s32 %s11, 1
        %s296 = sand.u32 %s71, 1
        %s297 = sand.u32 %s71, 1
        %s298 = smul.addr %s297, 96
        %s299 = scalar_lea.vmem [#allocation2], %s298
        // Predicated region
        $region63: #{tpu_custom_call.1} parent=61 // pred_check
          %p300 = pneg %p84
        $region64: #{tpu_custom_call.1} parent=61 // pred_check_branch
          %302 = sbr.rel (%p300) target = $region66
        $region65: #{tpu_custom_call.1} parent=61 // pred_region
          _
        $region66: #{tpu_custom_call.1} parent=61 // pred_fallthru
          _
        %p303 = scmp.lt.s32.totalorder %s21, 1
        %s304 = scalar_select %p303, %s21, 1
        %p305 = scmp.lt.s32.totalorder %s23, 0
        %s306 = scalar_select %p305, %s23, 0
        %s307 = sadd.s32 %s306, %s304
        %s308 = smul.addr %s307, 8
        %s309 = scalar_lea.vmem %s0, %s308
        %p310 = pneg %p58
        %p311 = pneg %p55
        %s312 = sand.u32 %s71, 1
        %s313 = sand.u32 %s71, 1
        %s314 = smul.addr %s313, 96
        %s315 = scalar_lea.vmem [#allocation2], %s314
        %p316 = pneg %p84
        %p317 = pneg %p81
        %p318 = pneg %p114
        %p319 = pneg %p111
        %p320 = scmp.lt.s32.totalorder %s21, 1
        %s321 = scalar_select %p320, %s21, 1
        %p322 = scmp.lt.s32.totalorder %s22, 7
        %s323 = scalar_select %p322, %s22, 7
        %p324 = scmp.lt.s32.totalorder %s23, 0
        %s325 = scalar_select %p324, %s23, 0
        %s326 = sadd.s32 %s325, %s323
        %s327 = smul.addr %s321, 8
        %s328 = sadd.s32 %s326, %s327
        %s329 = smul.addr %s328, 8
        %s330 = scalar_lea.vmem %s2, %s329
        %p331 = pneg %p144
        %p332 = pneg %p141
        %p333 = scmp.lt.s32.totalorder %s21, 1
        %s334 = scalar_select %p333, %s21, 1
        %p335 = scmp.lt.s32.totalorder %s22, 7
        %s336 = scalar_select %p335, %s22, 7
        %p337 = scmp.lt.s32.totalorder %s23, 0
        %s338 = scalar_select %p337, %s23, 0
        %s339 = sadd.s32 %s338, %s336
        %s340 = smul.addr %s334, 8
        %s341 = sadd.s32 %s339, %s340
        %s342 = smul.addr %s341, 8
        %s343 = scalar_lea.vmem %s3, %s342
        %p344 = pneg %p174
        %p345 = pneg %p171
        %p346 = scmp.lt.s32.totalorder %s21, 1
        %s347 = scalar_select %p346, %s21, 1
        %p348 = scmp.lt.s32.totalorder %s22, 7
        %s349 = scalar_select %p348, %s22, 7
        %p350 = scmp.lt.s32.totalorder %s23, 0
        %s351 = scalar_select %p350, %s23, 0
        %s352 = sadd.s32 %s351, %s349
        %s353 = smul.addr %s347, 8
        %s354 = sadd.s32 %s352, %s353
        %s355 = smul.addr %s354, 8
        %s356 = scalar_lea.vmem %s4, %s355
        %p357 = scmp.lt.s32.totalorder %s21, 1
        %s358 = scalar_select %p357, %s21, 1
        %p359 = scmp.lt.s32.totalorder %s23, 0
        %s360 = scalar_select %p359, %s23, 0
        %s361 = sadd.s32 %s360, %s358
        %s362 = smul.addr %s361, 8
        %s363 = scalar_lea.vmem %s0, %s362
        %p364 = scmp.lt.s32.totalorder %s21, 1
        %s365 = scalar_select %p364, %s21, 1
        %p366 = scmp.lt.s32.totalorder %s22, 7
        %s367 = scalar_select %p366, %s22, 7
        %p368 = scmp.lt.s32.totalorder %s23, 0
        %s369 = scalar_select %p368, %s23, 0
        %s370 = sadd.s32 %s369, %s367
        %s371 = smul.addr %s365, 8
        %s372 = sadd.s32 %s370, %s371
        %s373 = smul.addr %s372, 8
        %s374 = scalar_lea.vmem %s2, %s373
        %p375 = scmp.lt.s32.totalorder %s21, 1
        %s376 = scalar_select %p375, %s21, 1
        %p377 = scmp.lt.s32.totalorder %s22, 7
        %s378 = scalar_select %p377, %s22, 7
        %p379 = scmp.lt.s32.totalorder %s23, 0
        %s380 = scalar_select %p379, %s23, 0
        %s381 = sadd.s32 %s380, %s378
        %s382 = smul.addr %s376, 8
        %s383 = sadd.s32 %s381, %s382
        %s384 = smul.addr %s383, 8
        %s385 = scalar_lea.vmem %s3, %s384
        %p386 = scmp.lt.s32.totalorder %s21, 1
        %s387 = scalar_select %p386, %s21, 1
        %p388 = scmp.lt.s32.totalorder %s22, 7
        %s389 = scalar_select %p388, %s22, 7
        %p390 = scmp.lt.s32.totalorder %s23, 0
        %s391 = scalar_select %p390, %s23, 0
        %s392 = sadd.s32 %s391, %s389
        %s393 = smul.addr %s387, 8
        %s394 = sadd.s32 %s392, %s393
        %s395 = smul.addr %s394, 8
        %s396 = scalar_lea.vmem %s4, %s395
        %v397 = vld [vmem:[%s363] sm:$0xff]
        %v398 = vld [vmem:[%s299] sm:$0xff]
        %v399 = vld [vmem:[%s299 + $0x8] sm:$0xff]
        %v400 = vld [vmem:[%s299 + $0x10] sm:$0xff]
        %v401 = vld [vmem:[%s299 + $0x18] sm:$0xff]
        %vm402 = vcmask 261120
        %v404 = vsel %vm402, %v397, 0
        %406 = vmatprep.subr.mxu0 0.0
        %407 = vmatpush1.msra.mxu0 %v398
        %408 = vmatprep.subr.mxu0 0.0
        %409 = vmatpush1.msra.mxu0 %v399
        %410 = vmatprep.subr.mxu0 0.0
        %411 = vmatpush1.msra.mxu0 %v400
        %412 = vmatprep.subr.mxu0 0.0
        %413 = vmatpush1.msra.mxu0 %v401
        %414 = vmatprep.subr.mxu0 0.0
        %415 = vmatpush1.msra.mxu0 0.0
        %416 = vmatprep.subr.mxu0 0.0
        %417 = vmatpush1.msra.mxu0 0.0
        %418 = vmatprep.subr.mxu0 0.0
        %419 = vmatpush1.msra.mxu0 0.0
        %420 = vmatprep.subr.mxu0 0.0
        %421 = vmatpush1.msra.mxu0 0.0
        %422 = vmatprep.subr.mxu0 0.0
        %423 = vmatpush1.msra.mxu0 0.0
        %424 = vmatprep.subr.mxu0 0.0
        %425 = vmatpush1.msra.mxu0 0.0
        %426 = vmatprep.subr.mxu0 0.0
        %427 = vmatpush1.msra.mxu0 0.0
        %428 = vmatprep.subr.mxu0 0.0
        %429 = vmatpush1.msra.mxu0 0.0
        %430 = vmatprep.subr.mxu0 0.0
        %431 = vmatpush1.msra.mxu0 0.0
        %432 = vmatprep.subr.mxu0 0.0
        %433 = vmatpush1.msra.mxu0 0.0
        %434 = vmatprep.subr.mxu0 0.0
        %435 = vmatpush1.msra.mxu0 0.0
        %436 = vmatprep.subr.mxu0 0.0
        %437 = vmatpush1.msra.mxu0 0.0
        %438 = vmatprep.subr.mxu0 0.0
        %439 = vmatpush1.msra.mxu0 0.0
        %440 = vmatprep.subr.mxu0 0.0
        %441 = vmatpush1.msra.mxu0 0.0
        %442 = vmatprep.subr.mxu0 0.0
        %443 = vmatpush1.msra.mxu0 0.0
        %444 = vmatprep.subr.mxu0 0.0
        %445 = vmatpush1.msra.mxu0 0.0
        %446 = vmatprep.subr.mxu0 0.0
        %447 = vmatpush1.msra.mxu0 0.0
        %448 = vmatprep.subr.mxu0 0.0
        %449 = vmatpush1.msra.mxu0 0.0
        %450 = vmatprep.subr.mxu0 0.0
        %451 = vmatpush1.msra.mxu0 0.0
        %452 = vmatprep.subr.mxu0 0.0
        %453 = vmatpush1.msra.mxu0 0.0
        %454 = vmatprep.subr.mxu0 0.0
        %455 = vmatpush1.msra.mxu0 0.0
        %456 = vmatprep.subr.mxu0 0.0
        %457 = vmatpush1.msra.mxu0 0.0
        %458 = vmatprep.subr.mxu0 0.0
        %459 = vmatpush1.msra.mxu0 0.0
        %460 = vmatprep.subr.mxu0 0.0
        %461 = vmatpush1.msra.mxu0 0.0
        %462 = vmatprep.subr.mxu0 0.0
        %463 = vmatpush1.msra.mxu0 0.0
        %464 = vmatprep.subr.mxu0 0.0
        %465 = vmatpush1.msra.mxu0 0.0
        %466 = vmatprep.subr.mxu0 0.0
        %467 = vmatpush1.msra.mxu0 0.0
        %468 = vmatprep.subr.mxu0 0.0
        %469 = vmatpush1.msra.mxu0 0.0
        %470 = vmatprep.mubr.f32.mxu0 0.0
        %471 = vmatmul.mubr.f32.gmra.mrb[0].mxu0 %v404
        %v472 = vpop.f32.mrb[0].mxu0
        %v473 = vadd.f32 0.0, %v472
        %v474 = vpop.f32.mrb[0].mxu0
        %475 = vdwg.mxu0
        %s476 = scalar_lea.vmem %s299, 32 [#allocation2]
        %v477 = vld [vmem:[%s476] sm:$0xff]
        %v478 = vld [vmem:[%s476 + $0x8] sm:$0xff]
        %v479 = vld [vmem:[%s476 + $0x10] sm:$0xff]
        %v480 = vld [vmem:[%s476 + $0x18] sm:$0xff]
        %481 = vmatprep.subr.mxu0 0.0
        %482 = vmatpush1.msra.mxu0 %v477
        %483 = vmatprep.subr.mxu0 0.0
        %484 = vmatpush1.msra.mxu0 %v478
        %485 = vmatprep.subr.mxu0 0.0
        %486 = vmatpush1.msra.mxu0 %v479
        %487 = vmatprep.subr.mxu0 0.0
        %488 = vmatpush1.msra.mxu0 %v480
        %489 = vmatprep.subr.mxu0 0.0
        %490 = vmatpush1.msra.mxu0 0.0
        %491 = vmatprep.subr.mxu0 0.0
        %492 = vmatpush1.msra.mxu0 0.0
        %493 = vmatprep.subr.mxu0 0.0
        %494 = vmatpush1.msra.mxu0 0.0
        %495 = vmatprep.subr.mxu0 0.0
        %496 = vmatpush1.msra.mxu0 0.0
        %497 = vmatprep.subr.mxu0 0.0
        %498 = vmatpush1.msra.mxu0 0.0
        %499 = vmatprep.subr.mxu0 0.0
        %500 = vmatpush1.msra.mxu0 0.0
        %501 = vmatprep.subr.mxu0 0.0
        %502 = vmatpush1.msra.mxu0 0.0
        %503 = vmatprep.subr.mxu0 0.0
        %504 = vmatpush1.msra.mxu0 0.0
        %505 = vmatprep.subr.mxu0 0.0
        %506 = vmatpush1.msra.mxu0 0.0
        %507 = vmatprep.subr.mxu0 0.0
        %508 = vmatpush1.msra.mxu0 0.0
        %509 = vmatprep.subr.mxu0 0.0
        %510 = vmatpush1.msra.mxu0 0.0
        %511 = vmatprep.subr.mxu0 0.0
        %512 = vmatpush1.msra.mxu0 0.0
        %513 = vmatprep.subr.mxu0 0.0
        %514 = vmatpush1.msra.mxu0 0.0
        %515 = vmatprep.subr.mxu0 0.0
        %516 = vmatpush1.msra.mxu0 0.0
        %517 = vmatprep.subr.mxu0 0.0
        %518 = vmatpush1.msra.mxu0 0.0
        %519 = vmatprep.subr.mxu0 0.0
        %520 = vmatpush1.msra.mxu0 0.0
        %521 = vmatprep.subr.mxu0 0.0
        %522 = vmatpush1.msra.mxu0 0.0
        %523 = vmatprep.subr.mxu0 0.0
        %524 = vmatpush1.msra.mxu0 0.0
        %525 = vmatprep.subr.mxu0 0.0
        %526 = vmatpush1.msra.mxu0 0.0
        %527 = vmatprep.subr.mxu0 0.0
        %528 = vmatpush1.msra.mxu0 0.0
        %529 = vmatprep.subr.mxu0 0.0
        %530 = vmatpush1.msra.mxu0 0.0
        %531 = vmatprep.subr.mxu0 0.0
        %532 = vmatpush1.msra.mxu0 0.0
        %533 = vmatprep.subr.mxu0 0.0
        %534 = vmatpush1.msra.mxu0 0.0
        %535 = vmatprep.subr.mxu0 0.0
        %536 = vmatpush1.msra.mxu0 0.0
        %537 = vmatprep.subr.mxu0 0.0
        %538 = vmatpush1.msra.mxu0 0.0
        %539 = vmatprep.subr.mxu0 0.0
        %540 = vmatpush1.msra.mxu0 0.0
        %541 = vmatprep.subr.mxu0 0.0
        %542 = vmatpush1.msra.mxu0 0.0
        %543 = vmatprep.subr.mxu0 0.0
        %544 = vmatpush1.msra.mxu0 0.0
        %545 = vmatprep.mubr.f32.mxu0 0.0
        %546 = vmatmul.mubr.f32.gmra.mrb[0].mxu0 %v404
        %v547 = vpop.f32.mrb[0].mxu0
        %v548 = vadd.f32 0.0, %v547
        %v549 = vpop.f32.mrb[0].mxu0
        %550 = vdwg.mxu0
        %s551 = scalar_lea.vmem %s299, 64 [#allocation2]
        %v552 = vld [vmem:[%s551] sm:$0xff]
        %v553 = vld [vmem:[%s551 + $0x8] sm:$0xff]
        %v554 = vld [vmem:[%s551 + $0x10] sm:$0xff]
        %v555 = vld [vmem:[%s551 + $0x18] sm:$0xff]
        %556 = vmatprep.subr.mxu0 0.0
        %557 = vmatpush1.msra.mxu0 %v552
        %558 = vmatprep.subr.mxu0 0.0
        %559 = vmatpush1.msra.mxu0 %v553
        %560 = vmatprep.subr.mxu0 0.0
        %561 = vmatpush1.msra.mxu0 %v554
        %562 = vmatprep.subr.mxu0 0.0
        %563 = vmatpush1.msra.mxu0 %v555
        %564 = vmatprep.subr.mxu0 0.0
        %565 = vmatpush1.msra.mxu0 0.0
        %566 = vmatprep.subr.mxu0 0.0
        %567 = vmatpush1.msra.mxu0 0.0
        %568 = vmatprep.subr.mxu0 0.0
        %569 = vmatpush1.msra.mxu0 0.0
        %570 = vmatprep.subr.mxu0 0.0
        %571 = vmatpush1.msra.mxu0 0.0
        %572 = vmatprep.subr.mxu0 0.0
        %573 = vmatpush1.msra.mxu0 0.0
        %574 = vmatprep.subr.mxu0 0.0
        %575 = vmatpush1.msra.mxu0 0.0
        %576 = vmatprep.subr.mxu0 0.0
        %577 = vmatpush1.msra.mxu0 0.0
        %578 = vmatprep.subr.mxu0 0.0
        %579 = vmatpush1.msra.mxu0 0.0
        %580 = vmatprep.subr.mxu0 0.0
        %581 = vmatpush1.msra.mxu0 0.0
        %582 = vmatprep.subr.mxu0 0.0
        %583 = vmatpush1.msra.mxu0 0.0
        %584 = vmatprep.subr.mxu0 0.0
        %585 = vmatpush1.msra.mxu0 0.0
        %586 = vmatprep.subr.mxu0 0.0
        %587 = vmatpush1.msra.mxu0 0.0
        %588 = vmatprep.subr.mxu0 0.0
        %589 = vmatpush1.msra.mxu0 0.0
        %590 = vmatprep.subr.mxu0 0.0
        %591 = vmatpush1.msra.mxu0 0.0
        %592 = vmatprep.subr.mxu0 0.0
        %593 = vmatpush1.msra.mxu0 0.0
        %594 = vmatprep.subr.mxu0 0.0
        %595 = vmatpush1.msra.mxu0 0.0
        %596 = vmatprep.subr.mxu0 0.0
        %597 = vmatpush1.msra.mxu0 0.0
        %598 = vmatprep.subr.mxu0 0.0
        %599 = vmatpush1.msra.mxu0 0.0
        %600 = vmatprep.subr.mxu0 0.0
        %601 = vmatpush1.msra.mxu0 0.0
        %602 = vmatprep.subr.mxu0 0.0
        %603 = vmatpush1.msra.mxu0 0.0
        %604 = vmatprep.subr.mxu0 0.0
        %605 = vmatpush1.msra.mxu0 0.0
        %606 = vmatprep.subr.mxu0 0.0
        %607 = vmatpush1.msra.mxu0 0.0
        %608 = vmatprep.subr.mxu0 0.0
        %609 = vmatpush1.msra.mxu0 0.0
        %610 = vmatprep.subr.mxu0 0.0
        %611 = vmatpush1.msra.mxu0 0.0
        %612 = vmatprep.subr.mxu0 0.0
        %613 = vmatpush1.msra.mxu0 0.0
        %614 = vmatprep.subr.mxu0 0.0
        %615 = vmatpush1.msra.mxu0 0.0
        %616 = vmatprep.subr.mxu0 0.0
        %617 = vmatpush1.msra.mxu0 0.0
        %618 = vmatprep.subr.mxu0 0.0
        %619 = vmatpush1.msra.mxu0 0.0
        %620 = vmatprep.mubr.f32.mxu0 0.0
        %621 = vmatmul.mubr.f32.gmra.mrb[0].mxu0 %v404
        %v622 = vpop.f32.mrb[0].mxu0
        %v623 = vadd.f32 0.0, %v622
        %v624 = vpop.f32.mrb[0].mxu0
        %625 = vdwg.mxu0
        %vm626 = vcmask 31744
        %627 = vst.msk [vmem:[%s374] sm:$0xff] %vm626, %v473
        %628 = vst.msk [vmem:[%s385] sm:$0xff] %vm626, %v548
        %629 = vst.msk [vmem:[%s396] sm:$0xff] %vm626, %v623
        %p630 = scmp.lt.s32.totalorder %s21, 1
        %s631 = scalar_select %p630, %s21, 1
        %p632 = scmp.lt.s32.totalorder %s22, 7
        %s633 = scalar_select %p632, %s22, 7
        %p634 = scmp.lt.s32.totalorder %s23, 0
        %s635 = scalar_select %p634, %s23, 0
        %s636 = sadd.s32 %s635, %s633
        %s637 = smul.addr %s631, 8
        %s638 = sadd.s32 %s636, %s637
        %s639 = smul.addr %s638, 8
        %s640 = scalar_lea.vmem %s2, %s639
        %p641 = scmp.lt.s32.totalorder %s21, 1
        %s642 = scalar_select %p641, %s21, 1
        %p643 = scmp.lt.s32.totalorder %s22, 7
        %s644 = scalar_select %p643, %s22, 7
        %p645 = scmp.lt.s32.totalorder %s23, 0
        %s646 = scalar_select %p645, %s23, 0
        %s647 = sadd.s32 %s646, %s644
        %s648 = smul.addr %s642, 8
        %s649 = sadd.s32 %s647, %s648
        %s650 = smul.addr %s649, 8
        %s651 = scalar_lea.vmem %s3, %s650
        %p652 = scmp.lt.s32.totalorder %s21, 1
        %s653 = scalar_select %p652, %s21, 1
        %p654 = scmp.lt.s32.totalorder %s22, 7
        %s655 = scalar_select %p654, %s22, 7
        %p656 = scmp.lt.s32.totalorder %s23, 0
        %s657 = scalar_select %p656, %s23, 0
        %s658 = sadd.s32 %s657, %s655
        %s659 = smul.addr %s653, 8
        %s660 = sadd.s32 %s658, %s659
        %s661 = smul.addr %s660, 8
        %s662 = scalar_lea.vmem %s4, %s661
        // Predicated region
        $region67: #{tpu_custom_call.1} parent=61 // pred_check
          %p663 = pneg %p111
        $region68: #{tpu_custom_call.1} parent=61 // pred_check_branch
          %665 = sbr.rel (%p663) target = $region70
        $region69: #{tpu_custom_call.1} parent=61 // pred_region
          _
        $region70: #{tpu_custom_call.1} parent=61 // pred_fallthru
          _
        // Predicated region
        $region71: #{tpu_custom_call.1} parent=61 // pred_check
          %p666 = pneg %p141
        $region72: #{tpu_custom_call.1} parent=61 // pred_check_branch
          %668 = sbr.rel (%p666) target = $region74
        $region73: #{tpu_custom_call.1} parent=61 // pred_region
          _
        $region74: #{tpu_custom_call.1} parent=61 // pred_fallthru
          _
        // Predicated region
        $region75: #{tpu_custom_call.1} parent=61 // pred_check
          %p669 = pneg %p171
        $region76: #{tpu_custom_call.1} parent=61 // pred_check_branch
          %671 = sbr.rel (%p669) target = $region78
        $region77: #{tpu_custom_call.1} parent=61 // pred_region
          _
        $region78: #{tpu_custom_call.1} parent=61 // pred_fallthru
          _
      $region62: #{tpu_custom_call.1} parent=5 // pred_fallthru
        _
      %p672 = scmp.le.s32.totalorder 2, %s11
      // Predicated region
      $region79: #{tpu_custom_call.1} parent=5 // pred_check
        %p673 = pneg %p672
      $region80: #{tpu_custom_call.1} parent=5 // pred_check_branch
        %675 = sbr.rel (%p673) target = $region82
      $region81: #{tpu_custom_call.1} parent=5 // pred_region
        %s676 = ssub.s32 %s11, 2
        // Predicated region
        $region83: #{tpu_custom_call.1} parent=81 // pred_check
          %p677 = pneg %p117
        $region84: #{tpu_custom_call.1} parent=81 // pred_check_branch
          %679 = sbr.rel (%p677) target = $region86
        $region85: #{tpu_custom_call.1} parent=81 // pred_region
          %p680 = scmp.lt.s32.totalorder %s24, 1
          %s681 = scalar_select %p680, %s24, 1
          %p682 = scmp.lt.s32.totalorder %s25, 7
          %s683 = scalar_select %p682, %s25, 7
          %p684 = scmp.lt.s32.totalorder %s26, 0
          %s685 = scalar_select %p684, %s26, 0
          %s686 = sadd.s32 %s685, %s683
          %s687 = smul.addr %s681, 8
          %s688 = sadd.s32 %s686, %s687
          %s689 = smul.addr %s688, 8
          %s690 = scalar_lea.vmem %s2, %s689
        $region86: #{tpu_custom_call.1} parent=81 // pred_fallthru
          _
        // Predicated region
        $region87: #{tpu_custom_call.1} parent=81 // pred_check
          %p691 = pneg %p147
        $region88: #{tpu_custom_call.1} parent=81 // pred_check_branch
          %693 = sbr.rel (%p691) target = $region90
        $region89: #{tpu_custom_call.1} parent=81 // pred_region
          %p694 = scmp.lt.s32.totalorder %s24, 1
          %s695 = scalar_select %p694, %s24, 1
          %p696 = scmp.lt.s32.totalorder %s25, 7
          %s697 = scalar_select %p696, %s25, 7
          %p698 = scmp.lt.s32.totalorder %s26, 0
          %s699 = scalar_select %p698, %s26, 0
          %s700 = sadd.s32 %s699, %s697
          %s701 = smul.addr %s695, 8
          %s702 = sadd.s32 %s700, %s701
          %s703 = smul.addr %s702, 8
          %s704 = scalar_lea.vmem %s3, %s703
        $region90: #{tpu_custom_call.1} parent=81 // pred_fallthru
          _
        // Predicated region
        $region91: #{tpu_custom_call.1} parent=81 // pred_check
          %p705 = pneg %p177
        $region92: #{tpu_custom_call.1} parent=81 // pred_check_branch
          %707 = sbr.rel (%p705) target = $region94
        $region93: #{tpu_custom_call.1} parent=81 // pred_region
          %p708 = scmp.lt.s32.totalorder %s24, 1
          %s709 = scalar_select %p708, %s24, 1
          %p710 = scmp.lt.s32.totalorder %s25, 7
          %s711 = scalar_select %p710, %s25, 7
          %p712 = scmp.lt.s32.totalorder %s26, 0
          %s713 = scalar_select %p712, %s26, 0
          %s714 = sadd.s32 %s713, %s711
          %s715 = smul.addr %s709, 8
          %s716 = sadd.s32 %s714, %s715
          %s717 = smul.addr %s716, 8
          %s718 = scalar_lea.vmem %s4, %s717
        $region94: #{tpu_custom_call.1} parent=81 // pred_fallthru
          _
      $region82: #{tpu_custom_call.1} parent=5 // pred_fallthru
        _
    $region6: #{tpu_custom_call.1} parent=1 // loop_footer
      %s15 = sadd.s32 1, %s11
    $region7: #{tpu_custom_call.1} parent=1 // loop_footer_branch
      %10 = sbr.rel target = $region3
    $region8: #{tpu_custom_call.1} parent=1 // loop_exit
      _

</llo_original>
